<compile_context>
chip_gen: v7x
topology: tpu7x:2x2x1
jax: 0.10.0
libtpu: 0.0.40
codegen_flags: <defaults>
</compile_context>

<pallas_src>
import functools

import jax
import jax.numpy as jnp
from jax.experimental import pallas as pl
from jax.experimental.pallas import tpu as pltpu

EPS = 1e-6


def sublayer_connection_kernel(seed_ref, x_ref, a2_ref, b2_ref, w_ref, bw_ref,
                               o_ref, *, dropout_p, train):
    x = x_ref[...].astype(jnp.float32)                      # (TM, H)
    tm, h = x.shape

    # ---- LayerNorm (unbiased std, eps added to std) ----
    mean = jnp.mean(x, axis=-1, keepdims=True)
    diff = x - mean
    var_unbiased = jnp.sum(diff * diff, axis=-1, keepdims=True) * (1.0 / (h - 1))
    std = jnp.sqrt(var_unbiased)
    inv = jnp.reciprocal(std + EPS)                          # multiply, not per-element divide
    normed = a2_ref[...] * (diff * inv) + b2_ref[...]

    # ---- sublayer: linear hidden->hidden on the MXU (bf16 in, f32 acc) ----
    sub = jnp.dot(normed.astype(jnp.bfloat16), w_ref[...],
                  preferred_element_type=jnp.float32) + bw_ref[...]

    # ---- dropout (inverted, keep-prob scaling) ----
    if train and dropout_p > 0.0:
        # Counter-based hash PRNG (xxhash/murmur-style mixing), keep-test on
        # the raw uint32 bits.  Portable: plain jnp ops, no pltpu PRNG.
        row = jax.lax.broadcasted_iota(jnp.int32, sub.shape, 0)
        col = jax.lax.broadcasted_iota(jnp.int32, sub.shape, 1)
        grow = pl.program_id(0) * tm + row                   # global row index
        gidx = (grow * jnp.int32(h) + col).astype(jnp.uint32)
        u = gidx * jnp.uint32(2654435761)
        u = u + (seed_ref[0].astype(jnp.uint32) * jnp.uint32(2246822519)
                 + jnp.uint32(374761393))
        u = u ^ (u >> 16)
        u = u * jnp.uint32(2246822519)
        u = u ^ (u >> 13)
        u = u * jnp.uint32(3266489917)
        u = u ^ (u >> 16)
        thresh = min(int(round(dropout_p * 4294967296.0)), 4294967295)
        keep = u >= jnp.uint32(thresh)                       # P(keep) = 1 - p
        sub = jnp.where(keep, sub * jnp.float32(1.0 / (1.0 - dropout_p)),
                        jnp.float32(0.0))

    # ---- residual ----
    o_ref[...] = (x + sub).astype(o_ref.dtype)


def _round_up(a, b):
    return (a + b - 1) // b * b


def sublayer_connection(x, a2, b2, w, bw, seed, *,
                        dropout_p=0.1, train=True, tm=256):
    B, S, H = x.shape
    rows = B * S

    # Row tile: as large as possible (default 256), 8-sublane aligned, capped
    # by the (padded) number of rows.
    tm_eff = min(tm, _round_up(rows, 8))
    tm_eff = max(8, (tm_eff // 8) * 8)
    rows_p = _round_up(rows, tm_eff)

    x2 = x.reshape(rows, H)
    if rows_p != rows:
        x2 = jnp.pad(x2, ((0, rows_p - rows), (0, 0)))

    a2r = a2.reshape(1, H).astype(jnp.float32)
    b2r = b2.reshape(1, H).astype(jnp.float32)
    bwr = bw.reshape(1, H).astype(jnp.float32)
    wbf = w.astype(jnp.bfloat16)          # bf16 weights: MXU-native, half VMEM

    kernel = functools.partial(sublayer_connection_kernel,
                               dropout_p=float(dropout_p), train=bool(train))

    out = pl.pallas_call(
        kernel,
        out_shape=jax.ShapeDtypeStruct((rows_p, H), x.dtype),
        grid_spec=pltpu.PrefetchScalarGridSpec(
            num_scalar_prefetch=1,
            grid=(rows_p // tm_eff,),
            in_specs=[
                pl.BlockSpec((tm_eff, H), lambda i, s: (i, 0)),   # x rows
                pl.BlockSpec((1, H), lambda i, s: (0, 0)),        # a_2
                pl.BlockSpec((1, H), lambda i, s: (0, 0)),        # b_2
                pl.BlockSpec((H, H), lambda i, s: (0, 0)),        # W (resident)
                pl.BlockSpec((1, H), lambda i, s: (0, 0)),        # sublayer bias
            ],
            out_specs=pl.BlockSpec((tm_eff, H), lambda i, s: (i, 0)),
        ),
        compiler_params=pltpu.CompilerParams(
            dimension_semantics=("parallel",),          # row tiles independent
            vmem_limit_bytes=64 * 1024 * 1024),
    )(seed, x2, a2r, b2r, wbf, bwr)

    if rows_p != rows:
        out = out[:rows]
    return out.reshape(B, S, H)


def _reference_eval(x, a2, b2, w, bw):
    """Pure-JAX reference for train=False (no dropout)."""
    mean = x.mean(-1, keepdims=True)
    diff = x - mean
    var = (diff * diff).sum(-1, keepdims=True) / (x.shape[-1] - 1)
    std = jnp.sqrt(var)
    normed = a2 * diff / (std + EPS) + b2
    return x + (normed @ w + bw)


if __name__ == "__main__":
    B, S, H = 2, 8, 32
    dropout_p = 0.1

    key = jax.random.PRNGKey(0)
    kx, kw = jax.random.split(key)

    x = jax.random.normal(kx, (B, S, H), dtype=jnp.float32)

    # LayerNorm params (as in __init__: ones / zeros)
    a2 = jnp.ones((H,), dtype=jnp.float32)
    b2 = jnp.zeros((H,), dtype=jnp.float32)

    # Deterministic sublayer (linear) params
    w = jax.random.normal(kw, (H, H), dtype=jnp.float32) * (1.0 / jnp.sqrt(H))
    bw = jnp.zeros((H,), dtype=jnp.float32)

    seed = jnp.array([0], dtype=jnp.int32)

    # Eval-mode correctness check (deterministic: no dropout).
    out_eval = sublayer_connection(x, a2, b2, w, bw, seed,
                                   dropout_p=dropout_p, train=False)
    jax.block_until_ready(out_eval)
    ref = _reference_eval(x, a2, b2, w, bw)
    assert out_eval.shape == (B, S, H)
    assert jnp.allclose(out_eval, ref, atol=5e-2, rtol=5e-2), "eval-mode mismatch"

    # Training-mode run (dropout active).
    out_train = sublayer_connection(x, a2, b2, w, bw, seed,
                                    dropout_p=dropout_p, train=True)
    jax.block_until_ready(out_train)
    assert out_train.shape == (B, S, H)
    assert bool(jnp.all(jnp.isfinite(out_train)))

    print("KERNEL_OK")
</pallas_src>

<mosaic_0001>
module attributes {stable_mosaic.version = 11 : i64} {
  func.func @sublayer_connection_kernel(%arg0: i32, %arg1: memref<1xi32, #tpu.memory_space<smem>>, %arg2: memref<16x32xf32, #tpu.memory_space<vmem>>, %arg3: memref<1x32xf32, #tpu.memory_space<vmem>>, %arg4: memref<1x32xf32, #tpu.memory_space<vmem>>, %arg5: memref<32x32xbf16, #tpu.memory_space<vmem>>, %arg6: memref<1x32xf32, #tpu.memory_space<vmem>>, %arg7: memref<16x32xf32, #tpu.memory_space<vmem>>) attributes {dimension_semantics = [#tpu.dimension_semantics<parallel>], iteration_bounds = array<i64: 1>, scalar_prefetch = 1 : i64, scratch_operands = 0 : i64, tpu.core_type = #tpu.core_type<tc>, window_params = [{transform_indices = @transform_0, window_bounds = array<i64: 16, 32>}, {pipeline_mode = #tpu.pipeline_mode<synchronous>, transform_indices = @transform_1, window_bounds = array<i64: 1, 32>}, {pipeline_mode = #tpu.pipeline_mode<synchronous>, transform_indices = @transform_2, window_bounds = array<i64: 1, 32>}, {pipeline_mode = #tpu.pipeline_mode<synchronous>, transform_indices = @transform_3, window_bounds = array<i64: 32, 32>}, {pipeline_mode = #tpu.pipeline_mode<synchronous>, transform_indices = @transform_4, window_bounds = array<i64: 1, 32>}, {transform_indices = @transform_5, window_bounds = array<i64: 16, 32>}]} {
    %c0 = arith.constant 0 : index
    %c0_0 = arith.constant 0 : index
    %0 = vector.load %arg2[%c0, %c0_0] : memref<16x32xf32, #tpu.memory_space<vmem>>, vector<16x32xf32>
    %cst = arith.constant dense<0.000000e+00> : vector<16xf32>
    %1 = vector.multi_reduction <add>, %0, %cst [1] : vector<16x32xf32> to vector<16xf32>
    %2 = vector.shape_cast %1 : vector<16xf32> to vector<16x1xf32>
    %cst_1 = arith.constant 3.200000e+01 : f32
    %3 = vector.broadcast %cst_1 : f32 to vector<16x1xf32>
    %4 = arith.divf %2, %3 : vector<16x1xf32>
    %5 = vector.broadcast %4 : vector<16x1xf32> to vector<16x32xf32>
    %6 = arith.subf %0, %5 : vector<16x32xf32>
    %7 = arith.mulf %6, %6 : vector<16x32xf32>
    %cst_2 = arith.constant dense<0.000000e+00> : vector<16xf32>
    %8 = vector.multi_reduction <add>, %7, %cst_2 [1] : vector<16x32xf32> to vector<16xf32>
    %9 = vector.shape_cast %8 : vector<16xf32> to vector<16x1xf32>
    %cst_3 = arith.constant 0.0322580636 : f32
    %10 = vector.broadcast %cst_3 : f32 to vector<16x1xf32>
    %11 = arith.mulf %9, %10 : vector<16x1xf32>
    %12 = math.sqrt %11 : vector<16x1xf32>
    %cst_4 = arith.constant 9.99999997E-7 : f32
    %13 = vector.broadcast %cst_4 : f32 to vector<16x1xf32>
    %14 = arith.addf %12, %13 : vector<16x1xf32>
    %cst_5 = arith.constant 1.000000e+00 : f32
    %15 = vector.broadcast %cst_5 : f32 to vector<16x1xf32>
    %16 = arith.divf %15, %14 : vector<16x1xf32>
    %c0_6 = arith.constant 0 : index
    %c0_7 = arith.constant 0 : index
    %17 = vector.load %arg3[%c0_6, %c0_7] : memref<1x32xf32, #tpu.memory_space<vmem>>, vector<1x32xf32>
    %18 = vector.broadcast %16 : vector<16x1xf32> to vector<16x32xf32>
    %19 = arith.mulf %6, %18 : vector<16x32xf32>
    %20 = vector.broadcast %17 : vector<1x32xf32> to vector<16x32xf32>
    %21 = arith.mulf %20, %19 : vector<16x32xf32>
    %c0_8 = arith.constant 0 : index
    %c0_9 = arith.constant 0 : index
    %22 = vector.load %arg4[%c0_8, %c0_9] : memref<1x32xf32, #tpu.memory_space<vmem>>, vector<1x32xf32>
    %23 = vector.broadcast %22 : vector<1x32xf32> to vector<16x32xf32>
    %24 = arith.addf %21, %23 : vector<16x32xf32>
    %25 = arith.truncf %24 : vector<16x32xf32> to vector<16x32xbf16>
    %c0_10 = arith.constant 0 : index
    %c0_11 = arith.constant 0 : index
    %26 = vector.load %arg5[%c0_10, %c0_11] : memref<32x32xbf16, #tpu.memory_space<vmem>>, vector<32x32xbf16>
    %cst_12 = arith.constant dense<0.000000e+00> : vector<16x32xf32>
    %27 = tpu.matmul %25, %26, %cst_12 {dimension_numbers = #tpu.dot_dimension_numbers<[1], [0], [0], [1], [0, 0, 1, 1], [], []>} : vector<16x32xbf16>, vector<32x32xbf16>, vector<16x32xf32> -> vector<16x32xf32>
    %c0_13 = arith.constant 0 : index
    %c0_14 = arith.constant 0 : index
    %28 = vector.load %arg6[%c0_13, %c0_14] : memref<1x32xf32, #tpu.memory_space<vmem>>, vector<1x32xf32>
    %29 = vector.broadcast %28 : vector<1x32xf32> to vector<16x32xf32>
    %30 = arith.addf %27, %29 : vector<16x32xf32>
    %31 = arith.addf %0, %30 : vector<16x32xf32>
    %c0_15 = arith.constant 0 : index
    %c0_16 = arith.constant 0 : index
    %32 = vector.load %arg7[%c0_15, %c0_16] : memref<16x32xf32, #tpu.memory_space<vmem>>, vector<16x32xf32>
    tpu.vector_store %arg7[%c0_15, %c0_16], %31 {strides = array<i32>} : memref<16x32xf32, #tpu.memory_space<vmem>>, vector<16x32xf32>,
    return
  }
  func.func @transform_0(%arg0: i32, %arg1: memref<1xi32, #tpu.memory_space<smem>>) -> (i32, i32) {
    %c0_i32 = arith.constant 0 : i32
    %c0_i32_0 = arith.constant 0 : i32
    return %arg0, %c0_i32 : i32, i32
  }
  func.func @transform_1(%arg0: i32, %arg1: memref<1xi32, #tpu.memory_space<smem>>) -> (i32, i32) {
    %c0_i32 = arith.constant 0 : i32
    %c0_i32_0 = arith.constant 0 : i32
    %c0_i32_1 = arith.constant 0 : i32
    return %c0_i32, %c0_i32_0 : i32, i32
  }
  func.func @transform_2(%arg0: i32, %arg1: memref<1xi32, #tpu.memory_space<smem>>) -> (i32, i32) {
    %c0_i32 = arith.constant 0 : i32
    %c0_i32_0 = arith.constant 0 : i32
    %c0_i32_1 = arith.constant 0 : i32
    return %c0_i32, %c0_i32_0 : i32, i32
  }
  func.func @transform_3(%arg0: i32, %arg1: memref<1xi32, #tpu.memory_space<smem>>) -> (i32, i32) {
    %c0_i32 = arith.constant 0 : i32
    %c0_i32_0 = arith.constant 0 : i32
    %c0_i32_1 = arith.constant 0 : i32
    return %c0_i32, %c0_i32_0 : i32, i32
  }
  func.func @transform_4(%arg0: i32, %arg1: memref<1xi32, #tpu.memory_space<smem>>) -> (i32, i32) {
    %c0_i32 = arith.constant 0 : i32
    %c0_i32_0 = arith.constant 0 : i32
    %c0_i32_1 = arith.constant 0 : i32
    return %c0_i32, %c0_i32_0 : i32, i32
  }
  func.func @transform_5(%arg0: i32, %arg1: memref<1xi32, #tpu.memory_space<smem>>) -> (i32, i32) {
    %c0_i32 = arith.constant 0 : i32
    %c0_i32_0 = arith.constant 0 : i32
    return %arg0, %c0_i32 : i32, i32
  }
}

</mosaic_0001>

<llo_original>
// kernel: tpu_custom_call.1
$region0: #{tpu_custom_call.1}
  #allocation0 [shape = 'u32[]', space=smem, size = 0x4, offset = 0x4, fixed_abs, tag = 'smem constant byte address 0x4 - core index']
  #allocation1 [shape = 'u32[144,128]{1,0:T(1,128)}', space=vmem, size = 0x12000, scoped, tag = 'internal scratch']
  #allocation2 [shape = 's32[1]{0}', space=sflag, size = 0x4, scoped, tag = 'scoped memory for tpu_custom_call.1']
  #allocation3 [shape = 's32[1]{0:T(128)S(6)}', space=smem, size = 0x200, scoped, tag = 'prefetched SMEM operand 0']
  %s0 = inlined_call_operand.<no memory space> [shape: s32[1], index: 0, kind: input, shape index: {}]
  %s1 = inlined_call_operand.hbm [shape: f32[16,32], index: 1, kind: input, shape index: {}]
  %s2 = inlined_call_operand.hbm [shape: f32[1,32], index: 2, kind: input, shape index: {}]
  %s3 = inlined_call_operand.hbm [shape: f32[1,32], index: 3, kind: input, shape index: {}]
  %s4 = inlined_call_operand.hbm [shape: bf16[32,32], index: 4, kind: input, shape index: {}]
  %s5 = inlined_call_operand.hbm [shape: f32[1,32], index: 5, kind: input, shape index: {}]
  %s6 = inlined_call_operand.hbm [shape: f32[16,32], index: 6, kind: output, shape index: {}]
  %s7 = sld [smem:[#allocation0]]
  $region50: #{tpu_custom_call.1} parent=0
    _
  %s9 = ssub.s32 1, %s7
  %s10 = scalar_select 0, %s9, %s7
  %11 = sst [smem:[#allocation3]] %s0
  $region1: #{tpu_custom_call.1} parent=0
    #allocation4 [shape = 'u8[8192]{0}', space=vmem, size = 0x2000, scoped, tag = 'input window, operand 1, single buffered']
    #allocation5 [shape = 's32[1]{0}', space=sflag, size = 0x4, scoped, tag = 'scoped memory for tpu_custom_call.1']
    #allocation6 [shape = 's32[1]{0}', space=sflag, size = 0x4, scoped, tag = 'scoped memory for tpu_custom_call.1']
    #allocation7 [shape = 'u8[512]{0}', space=vmem, size = 0x400, scoped, tag = 'input window, operand 2, single buffered']
    #allocation8 [shape = 's32[1]{0}', space=sflag, size = 0x4, scoped, tag = 'scoped memory for tpu_custom_call.1']
    #allocation9 [shape = 'u8[512]{0}', space=vmem, size = 0x400, scoped, tag = 'input window, operand 3, single buffered']
    #allocation10 [shape = 'u8[8192]{0}', space=vmem, size = 0x2000, scoped, tag = 'input window, operand 4, single buffered']
    #allocation11 [shape = 's32[1]{0}', space=sflag, size = 0x4, scoped, tag = 'scoped memory for tpu_custom_call.1']
    #allocation12 [shape = 'u8[512]{0}', space=vmem, size = 0x400, scoped, tag = 'input window, operand 5, single buffered']
    #allocation13 [shape = 'u8[8192]{0}', space=vmem, size = 0x2000, scoped, tag = 'output window, operand 0, single buffered']
    %12 = vsyncpa [#allocation5], 0
    %13 = vsyncpa [#allocation8], 0
    %14 = vsyncpa [#allocation11], 0
    %15 = vsyncpa [#allocation6], 0
    // Predicated region
    $region2: #{tpu_custom_call.1} parent=1 // pred_check
      _
    $region3: #{tpu_custom_call.1} parent=1 // pred_check_branch
      %17 = sbr.rel (0) target = $region5
    $region4: #{tpu_custom_call.1} parent=1 // pred_region
      %s19 = ssub.s32 256, 256
      %20 = vsyncadd [#allocation5], %s19
      %s21 = sshll.u32 [#allocation4], 4
      %s22 = int_to_ptr.vmem [resolvable:$true] %s21
      %27 = dma.hbm_to_vmem [thread:$0]  %s1, 256, %s22, [#allocation5], 128, 128, 8
    $region5: #{tpu_custom_call.1} parent=1 // pred_fallthru
      _
    // Predicated region
    $region6: #{tpu_custom_call.1} parent=1 // pred_check
      _
    $region7: #{tpu_custom_call.1} parent=1 // pred_check_branch
      %29 = sbr.rel (0) target = $region9
    $region8: #{tpu_custom_call.1} parent=1 // pred_region
      %s31 = ssub.s32 16, 16
      %32 = vsyncadd [#allocation8], %s31
      %s34 = sshll.u32 [#allocation7], 4
      %s35 = int_to_ptr.vmem [resolvable:$true] %s34
      %37 = dma.hbm_to_vmem [thread:$0]  %s2, 16, %s35, [#allocation8]
    $region9: #{tpu_custom_call.1} parent=1 // pred_fallthru
      _
    // Predicated region
    $region10: #{tpu_custom_call.1} parent=1 // pred_check
      _
    $region11: #{tpu_custom_call.1} parent=1 // pred_check_branch
      %39 = sbr.rel (0) target = $region13
    $region12: #{tpu_custom_call.1} parent=1 // pred_region
      %s41 = ssub.s32 16, 16
      %42 = vsyncadd [#allocation8], %s41
      %s44 = sshll.u32 [#allocation9], 4
      %s45 = int_to_ptr.vmem [resolvable:$true] %s44
      %47 = dma.hbm_to_vmem [thread:$0]  %s3, 16, %s45, [#allocation8]
    $region13: #{tpu_custom_call.1} parent=1 // pred_fallthru
      _
    // Predicated region
    $region14: #{tpu_custom_call.1} parent=1 // pred_check
      _
    $region15: #{tpu_custom_call.1} parent=1 // pred_check_branch
      %49 = sbr.rel (0) target = $region17
    $region16: #{tpu_custom_call.1} parent=1 // pred_region
      %s51 = ssub.s32 256, 256
      %52 = vsyncadd [#allocation11], %s51
      %s53 = sshll.u32 [#allocation10], 4
      %s54 = int_to_ptr.vmem [resolvable:$true] %s53
      %59 = dma.hbm_to_vmem [thread:$0]  %s4, 256, %s54, [#allocation11], 64, 64, 4
    $region17: #{tpu_custom_call.1} parent=1 // pred_fallthru
      _
    // Predicated region
    $region18: #{tpu_custom_call.1} parent=1 // pred_check
      _
    $region19: #{tpu_custom_call.1} parent=1 // pred_check_branch
      %61 = sbr.rel (0) target = $region21
    $region20: #{tpu_custom_call.1} parent=1 // pred_region
      %s63 = ssub.s32 16, 16
      %64 = vsyncadd [#allocation11], %s63
      %s66 = sshll.u32 [#allocation12], 4
      %s67 = int_to_ptr.vmem [resolvable:$true] %s66
      %69 = dma.hbm_to_vmem [thread:$0]  %s5, 16, %s67, [#allocation11]
    $region21: #{tpu_custom_call.1} parent=1 // pred_fallthru
      _
    // Predicated region
    $region22: #{tpu_custom_call.1} parent=1 // pred_check
      _
    $region23: #{tpu_custom_call.1} parent=1 // pred_check_branch
      %71 = sbr.rel (0) target = $region25
    $region24: #{tpu_custom_call.1} parent=1 // pred_region
      %72 = dma.done [#allocation5], 256
    $region25: #{tpu_custom_call.1} parent=1 // pred_fallthru
      _
    // Predicated region
    $region26: #{tpu_custom_call.1} parent=1 // pred_check
      _
    $region27: #{tpu_custom_call.1} parent=1 // pred_check_branch
      %74 = sbr.rel (0) target = $region29
    $region28: #{tpu_custom_call.1} parent=1 // pred_region
      %75 = dma.done [#allocation8], 16
    $region29: #{tpu_custom_call.1} parent=1 // pred_fallthru
      _
    // Predicated region
    $region30: #{tpu_custom_call.1} parent=1 // pred_check
      _
    $region31: #{tpu_custom_call.1} parent=1 // pred_check_branch
      %77 = sbr.rel (0) target = $region33
    $region32: #{tpu_custom_call.1} parent=1 // pred_region
      %78 = dma.done [#allocation8], 16
    $region33: #{tpu_custom_call.1} parent=1 // pred_fallthru
      _
    // Predicated region
    $region34: #{tpu_custom_call.1} parent=1 // pred_check
      _
    $region35: #{tpu_custom_call.1} parent=1 // pred_check_branch
      %80 = sbr.rel (0) target = $region37
    $region36: #{tpu_custom_call.1} parent=1 // pred_region
      %81 = dma.done [#allocation11], 256
    $region37: #{tpu_custom_call.1} parent=1 // pred_fallthru
      _
    // Predicated region
    $region38: #{tpu_custom_call.1} parent=1 // pred_check
      _
    $region39: #{tpu_custom_call.1} parent=1 // pred_check_branch
      %83 = sbr.rel (0) target = $region41
    $region40: #{tpu_custom_call.1} parent=1 // pred_region
      %84 = dma.done [#allocation11], 16
    $region41: #{tpu_custom_call.1} parent=1 // pred_fallthru
      _
    %v86 = vld [vmem:[#allocation4] sm:$0xff]
    %v87 = vld [vmem:[#allocation4 + $0x8] sm:$0xff]
    %vm88 = vcmask 261120
    %v89 = vsel %vm88, %v86, 0.0
    %90 = vadd.xlane.f32.xlu0 %v89
    %v91 = vpop.xlane.xlu0 %90
    %v92 = vsel %vm88, %v87, 0.0
    %93 = vadd.xlane.f32.xlu0 %v92
    %v94 = vpop.xlane.xlu0 %93
    %v95 = vrcp.pop 32.0
    %v96 = vmul.f32 %v91, %v95
    %v97 = vmul.f32 %v94, %v95
    %v98 = vsub.f32 %v86, %v96
    %v99 = vsub.f32 %v87, %v97
    %v100 = vmul.f32 %v98, %v98
    %v101 = vmul.f32 %v99, %v99
    %v102 = vsel %vm88, %v100, 0.0
    %103 = vadd.xlane.f32.xlu0 %v102
    %v104 = vpop.xlane.xlu0 %103
    %v105 = vsel %vm88, %v101, 0.0
    %106 = vadd.xlane.f32.xlu0 %v105
    %v107 = vpop.xlane.xlu0 %106
    %v108 = vmul.f32 %v104, 0.032258064
    %v109 = vmul.f32 %v107, 0.032258064
    %v110 = vrsqrt.pop %v108
    %v111 = vmul.f32 %v108, %v110
    %vm112 = vcmp.eq.f32.partialorder %v108, inf
    %v113 = vsel %vm112, %v108, %v111
    %vm114 = vcmp.eq.f32.partialorder %v108, 0.0
    %v115 = vand.u32 %v108, 2147483648
    %v116 = vsel %vm114, %v115, %v113
    %v117 = vrsqrt.pop %v109
    %v118 = vmul.f32 %v109, %v117
    %vm119 = vcmp.eq.f32.partialorder %v109, inf
    %v120 = vsel %vm119, %v109, %v118
    %vm121 = vcmp.eq.f32.partialorder %v109, 0.0
    %v122 = vand.u32 %v109, 2147483648
    %v123 = vsel %vm121, %v122, %v120
    %v124 = vadd.f32 %v116, 1e-06
    %v125 = vadd.f32 %v123, 1e-06
    %v126 = vrcp.pop %v124
    %v127 = vmul.f32 1.0, %v126
    %v128 = vrcp.pop %v125
    %v129 = vmul.f32 1.0, %v128
    %v130 = vld [vmem:[#allocation7] sm:$0x1]
    %v131 = vmul.f32 %v98, %v127
    %v132 = vmul.f32 %v99, %v129
    %v134 = vlaneseq
    %v135 = vshrl.u32 %v134, 7
    %v136 = vsub.s32 0, %v135
    %v137 = vrot.slane %v130, %v136
    %v139 = vmul.f32 %v137, %v131
    %v140 = vmul.f32 %v137, %v132
    %v141 = vld [vmem:[#allocation9] sm:$0x1]
    %v143 = vlaneseq
    %v144 = vshrl.u32 %v143, 7
    %v145 = vsub.s32 0, %v144
    %v146 = vrot.slane %v141, %v145
    %v148 = vadd.f32 %v139, %v146
    %v149 = vadd.f32 %v140, %v146
    %v150 = vpack.c.bf16 %v149, %v148
    %v151 = vld [vmem:[#allocation10] sm:$0xf]
    %v152 = vld [vmem:[#allocation10 + $0x4] sm:$0xf]
    %v153 = vld [vmem:[#allocation10 + $0x8] sm:$0xf]
    %v154 = vld [vmem:[#allocation10 + $0xc] sm:$0xf]
    %v155 = vld [vmem:[#allocation12] sm:$0x1]
    %v157 = vlaneseq
    %v158 = vshrl.u32 %v157, 7
    %v159 = vsub.s32 0, %v158
    %v160 = vrot.slane %v155, %v159
    %v166 = vunpack.c.l.b16 %v151
    %v167 = vunpack.c.l.b16 %v152
    %v168 = vunpack.c.l.b16 %v153
    %v169 = vunpack.c.l.b16 %v154
    %v170 = vpack.c.b16 %v167, %v166
    %v171 = vpack.c.b16 %v169, %v168
    %v175 = vsel %vm88, %v150, 0
    %177 = vmatprep.subr.bf16.mxu0 0
    %178 = vmatpush1.bf16.msra.mxu0 %v170
    %179 = vmatprep.subr.bf16.mxu0 0
    %180 = vmatpush1.bf16.msra.mxu0 %v171
    %181 = vmatprep.subr.bf16.mxu0 0
    %182 = vmatpush1.bf16.msra.mxu0 0
    %183 = vmatprep.subr.bf16.mxu0 0
    %184 = vmatpush1.bf16.msra.mxu0 0
    %185 = vmatprep.subr.bf16.mxu0 0
    %186 = vmatpush1.bf16.msra.mxu0 0
    %187 = vmatprep.subr.bf16.mxu0 0
    %188 = vmatpush1.bf16.msra.mxu0 0
    %189 = vmatprep.subr.bf16.mxu0 0
    %190 = vmatpush1.bf16.msra.mxu0 0
    %191 = vmatprep.subr.bf16.mxu0 0
    %192 = vmatpush1.bf16.msra.mxu0 0
    %193 = vmatprep.subr.bf16.mxu0 0
    %194 = vmatpush1.bf16.msra.mxu0 0
    %195 = vmatprep.subr.bf16.mxu0 0
    %196 = vmatpush1.bf16.msra.mxu0 0
    %197 = vmatprep.subr.bf16.mxu0 0
    %198 = vmatpush1.bf16.msra.mxu0 0
    %199 = vmatprep.subr.bf16.mxu0 0
    %200 = vmatpush1.bf16.msra.mxu0 0
    %201 = vmatprep.subr.bf16.mxu0 0
    %202 = vmatpush1.bf16.msra.mxu0 0
    %203 = vmatprep.subr.bf16.mxu0 0
    %204 = vmatpush1.bf16.msra.mxu0 0
    %205 = vmatprep.subr.bf16.mxu0 0
    %206 = vmatpush1.bf16.msra.mxu0 0
    %207 = vmatprep.subr.bf16.mxu0 0
    %208 = vmatpush1.bf16.msra.mxu0 0
    %209 = vmatprep.mubr.bf16.mxu0 0
    %210 = vmatmul.mubr.bf16.gmra.mrb[0].mxu0 %v175
    %v211 = vpop.f32.mrb[0].mxu0
    %v212 = vadd.f32 %v160, %v211
    %v213 = vpop.f32.mrb[0].mxu0
    %v214 = vpop.f32.mrb[0].mxu0
    %v215 = vadd.f32 %v160, %v214
    %v216 = vpop.f32.mrb[0].mxu0
    %217 = vdwg.mxu0
    %v218 = vadd.f32 %v86, %v212
    %v219 = vadd.f32 %v87, %v215
    %220 = vst.msk [vmem:[#allocation13] sm:$0xff] %vm88, %v218
    %221 = vst.msk [vmem:[#allocation13 + $0x8] sm:$0xff] %vm88, %v219
    // Predicated region
    $region42: #{tpu_custom_call.1} parent=1 // pred_check
      _
    $region43: #{tpu_custom_call.1} parent=1 // pred_check_branch
      %223 = sbr.rel (0) target = $region45
    $region44: #{tpu_custom_call.1} parent=1 // pred_region
      %s225 = ssub.s32 256, 256
      %226 = vsyncadd [#allocation6], %s225
      %s227 = sshll.u32 [#allocation13], 4
      %s228 = int_to_ptr.vmem [resolvable:$true] %s227
      %233 = dma.vmem_to_hbm [thread:$0]  %s228, 256, %s6, [#allocation6], 128, 128, 8
    $region45: #{tpu_custom_call.1} parent=1 // pred_fallthru
      _
    // Predicated region
    $region46: #{tpu_custom_call.1} parent=1 // pred_check
      _
    $region47: #{tpu_custom_call.1} parent=1 // pred_check_branch
      %235 = sbr.rel (0) target = $region49
    $region48: #{tpu_custom_call.1} parent=1 // pred_region
      %236 = dma.done [#allocation6], 256
    $region49: #{tpu_custom_call.1} parent=1 // pred_fallthru
      _
    %237 = vsyncpa [#allocation5], 1
    %238 = vsyncpa [#allocation8], 1
    %239 = vsyncpa [#allocation11], 1
    %240 = vsyncpa [#allocation6], 1

</llo_original>
